<compile_context>
chip_gen: v7x
topology: tpu7x:2x2x1
jax: 0.10.0
libtpu: 0.0.40
codegen_flags: <defaults>
</compile_context>

<pallas_src>
import jax
import jax.numpy as jnp
from jax.experimental import pallas as pl
from jax.experimental.pallas import tpu as pltpu


def _rotate_half(x):
    half = x.shape[-1] // 2
    return jnp.concatenate([-x[..., half:], x[..., :half]], axis=-1)


def rope_kernel(q_ref, k_ref, cs_ref, qo_ref, ko_ref):
    # q_ref/k_ref/qo_ref/ko_ref: (1, H, Sb, D)
    # cs_ref:                    (1, Sb, 2*D)  -- cos = [..., :D], sin = [..., D:]
    q = q_ref[...]
    k = k_ref[...]
    cs = cs_ref[...]
    d = q.shape[-1]
    cos = cs[:, None, :, :d]          # broadcast over the head axis
    sin = cs[:, None, :, d:]
    qo_ref[...] = q * cos + _rotate_half(q) * sin
    ko_ref[...] = k * cos + _rotate_half(k) * sin


def _sublane_multiple(dtype):
    # Sub-32-bit dtypes pack 2/4 rows per sublane; keep seq tiles a multiple of
    # the packed-row granularity (8 for f32, 16 for bf16, 32 for int8/fp8).
    return 8 * max(1, 4 // jnp.dtype(dtype).itemsize)


def _pick_seq_block(S, H, D, dtype, target_block_bytes=2 << 20):
    """Largest seq tile that divides S, respects the sublane packing rule, and
    keeps a single (1, H, Sb, D) q/k block around ~target_block_bytes.  2 MiB
    blocks reach ~85%+ of HBM roofline while the double-buffered working set
    (~9x the q/k block) stays well under every generation's physical VMEM."""
    itemsize = jnp.dtype(dtype).itemsize
    step = _sublane_multiple(dtype)
    if S <= step or (S % step) != 0:
        return S                      # full-dim block always satisfies tiling
    best = step
    for sb in range(step, S + 1, step):
        if S % sb:
            continue
        if H * sb * D * itemsize <= target_block_bytes:
            best = sb
    return best


def rotary_embedding_pallas(q, k, cos_sin_gathered, *, in_place=False,
                            target_block_bytes=2 << 20):
    """q, k: [B, H, S, D]; cos_sin_gathered: [B, S, 2*D] (cos | sin fused)."""
    B, H, S, D = q.shape
    assert cos_sin_gathered.shape == (B, S, 2 * D)

    itemsize = jnp.dtype(q.dtype).itemsize
    sb = _pick_seq_block(S, H, D, q.dtype, target_block_bytes)
    grid = (B, S // sb)

    # Head axis folded into the block; sequence tiled.  The fused cos/sin block
    # is indexed only by (b, s) so it is fetched once per block, never per head.
    qk_spec = pl.BlockSpec((1, H, sb, D), lambda b, s: (b, 0, s, 0))
    cs_spec = pl.BlockSpec((1, sb, 2 * D), lambda b, s: (b, s, 0))
    # TODO(synk): for head_dim < 128 the (sb, D) tiles are lane-padded (masked
    # vst); a [B, H, D, S] layout with S on lanes would be fully lane-dense but
    # only pays off if producers/consumers adopt that layout end-to-end.
    # TODO(synk): for contiguous position_ids, index the [max_pos, 2D] cache
    # directly in the BlockSpec index_map via scalar-prefetched offsets and
    # drop the materialized [B, S, 2D] table entirely.

    # Explicit scoped-VMEM budget: double-buffered working set of all blocks
    # plus headroom, clamped to 48 MiB (safe under v7x's 64 MiB physical VMEM
    # and v5e/v6e's 128 MiB, and above v5e's 16 MiB default scoped limit).
    qk_block_bytes = H * sb * D * itemsize
    cs_block_bytes = sb * 2 * D * jnp.dtype(cos_sin_gathered.dtype).itemsize
    working_set = 2 * (4 * qk_block_bytes + cs_block_bytes)
    vmem_limit = int(min(max(2 * working_set, 16 << 20), 48 << 20))

    return pl.pallas_call(
        rope_kernel,
        out_shape=(
            jax.ShapeDtypeStruct(q.shape, q.dtype),
            jax.ShapeDtypeStruct(k.shape, k.dtype),
        ),
        grid_spec=pltpu.PrefetchScalarGridSpec(
            num_scalar_prefetch=0,
            grid=grid,
            in_specs=[qk_spec, qk_spec, cs_spec],
            out_specs=[qk_spec, qk_spec],
        ),
        compiler_params=pltpu.CompilerParams(
            dimension_semantics=("parallel", "parallel"),
            vmem_limit_bytes=vmem_limit,
        ),
        # Only alias when the caller truly donates q/k (e.g. decode loops);
        # otherwise XLA would insert defensive copies and negate the win.
        input_output_aliases=({0: 0, 1: 1} if in_place else {}),
    )(q, k, cos_sin_gathered)


class RotaryEmbedding:
    """JAX/Pallas port of the GPT-NeoX RotaryEmbedding module."""

    def __init__(self, dim, max_position_embeddings, base=10000):
        self.dim = dim
        self.max_seq_len_cached = max_position_embeddings
        # deterministic "parameter" (buffer) init, same formula as PyTorch
        self.inv_freq = 1.0 / (
            base ** (jnp.arange(0, dim, 2, dtype=jnp.float32) / dim)
        )
        self.cos_cached = None
        self.sin_cached = None
        self._cos_sin_cached = None   # fused [max_pos, 2*dim] table for kernel
        self._cache_dtype = None

    def _create_cos_sin(self, max_pos, dtype):
        t = jnp.arange(max_pos, dtype=self.inv_freq.dtype)
        freqs = jnp.einsum("i,j->ij", t, self.inv_freq)
        emb = jnp.concatenate([freqs, freqs], axis=-1)
        cos = jnp.cos(emb).astype(dtype)
        sin = jnp.sin(emb).astype(dtype)
        cos_sin = jnp.concatenate([cos, sin], axis=-1)   # [max_pos, 2*dim]
        return cos, sin, cos_sin

    def __call__(self, q, k, position_ids, seq_len=None):
        # Cache construction is Python-side state; keep it outside traced code
        # (seq_len must be a concrete int here), matching the PyTorch module.
        if seq_len is None:
            seq_len = q.shape[2]
        dtype = q.dtype
        if (
            self.cos_cached is None
            or self.sin_cached is None
            or seq_len > self.max_seq_len_cached
            or self._cache_dtype != dtype          # rebuild on dtype change
        ):
            if seq_len > self.max_seq_len_cached:
                self.max_seq_len_cached = seq_len
            (self.cos_cached,
             self.sin_cached,
             self._cos_sin_cached) = self._create_cos_sin(
                self.max_seq_len_cached, dtype
            )
            self._cache_dtype = dtype
        # Per-position fused table [B, S, 2D] (single plain-JAX gather glue).
        # NOTE: like torch's cos[position_ids] semantics, out-of-range ids are
        # not rebuilt here; jnp.take clamps them.
        cs_g = jnp.take(self._cos_sin_cached, position_ids, axis=0)
        return rotary_embedding_pallas(q, k, cs_g)


def _reference(q, k, cos_cached, sin_cached, position_ids):
    cos = jnp.take(cos_cached, position_ids, axis=0)[:, None, :, :]
    sin = jnp.take(sin_cached, position_ids, axis=0)[:, None, :, :]
    return q * cos + _rotate_half(q) * sin, k * cos + _rotate_half(k) * sin


if __name__ == "__main__":
    B, H, S, D = 2, 4, 8, 32
    max_pos = 16

    key = jax.random.PRNGKey(0)
    kq, kk, kp = jax.random.split(key, 3)
    q = jax.random.normal(kq, (B, H, S, D), dtype=jnp.float32)
    k = jax.random.normal(kk, (B, H, S, D), dtype=jnp.float32)
    position_ids = jax.random.randint(kp, (B, S), 0, max_pos, dtype=jnp.int32)

    rope = RotaryEmbedding(dim=D, max_position_embeddings=max_pos)
    q_embed, k_embed = rope(q, k, position_ids, seq_len=S)
    jax.block_until_ready((q_embed, k_embed))

    q_ref, k_ref = _reference(q, k, rope.cos_cached, rope.sin_cached, position_ids)
    assert jnp.allclose(q_embed, q_ref, atol=1e-5, rtol=1e-5)
    assert jnp.allclose(k_embed, k_ref, atol=1e-5, rtol=1e-5)

    print("KERNEL_OK")
</pallas_src>

<mosaic_0001>
module attributes {stable_mosaic.version = 11 : i64} {
  func.func @rope_kernel(%arg0: i32, %arg1: i32, %arg2: memref<1x4x8x32xf32, #tpu.memory_space<vmem>>, %arg3: memref<1x4x8x32xf32, #tpu.memory_space<vmem>>, %arg4: memref<1x8x64xf32, #tpu.memory_space<vmem>>, %arg5: memref<1x4x8x32xf32, #tpu.memory_space<vmem>>, %arg6: memref<1x4x8x32xf32, #tpu.memory_space<vmem>>) attributes {dimension_semantics = [#tpu.dimension_semantics<parallel>, #tpu.dimension_semantics<parallel>], iteration_bounds = array<i64: 2, 1>, scalar_prefetch = 0 : i64, scratch_operands = 0 : i64, tpu.core_type = #tpu.core_type<tc>, window_params = [{transform_indices = @transform_0, window_bounds = array<i64: 1, 4, 8, 32>}, {transform_indices = @transform_1, window_bounds = array<i64: 1, 4, 8, 32>}, {transform_indices = @transform_2, window_bounds = array<i64: 1, 8, 64>}, {transform_indices = @transform_3, window_bounds = array<i64: 1, 4, 8, 32>}, {transform_indices = @transform_4, window_bounds = array<i64: 1, 4, 8, 32>}]} {
    %c0 = arith.constant 0 : index
    %c0_0 = arith.constant 0 : index
    %c0_1 = arith.constant 0 : index
    %c0_2 = arith.constant 0 : index
    %0 = vector.load %arg2[%c0, %c0_0, %c0_1, %c0_2] : memref<1x4x8x32xf32, #tpu.memory_space<vmem>>, vector<1x4x8x32xf32>
    %c0_3 = arith.constant 0 : index
    %c0_4 = arith.constant 0 : index
    %c0_5 = arith.constant 0 : index
    %c0_6 = arith.constant 0 : index
    %1 = vector.load %arg3[%c0_3, %c0_4, %c0_5, %c0_6] : memref<1x4x8x32xf32, #tpu.memory_space<vmem>>, vector<1x4x8x32xf32>
    %c0_7 = arith.constant 0 : index
    %c0_8 = arith.constant 0 : index
    %c0_9 = arith.constant 0 : index
    %2 = vector.load %arg4[%c0_7, %c0_8, %c0_9] : memref<1x8x64xf32, #tpu.memory_space<vmem>>, vector<1x8x64xf32>
    %3 = vector.extract_strided_slice %2 {offsets = [0, 0, 0], sizes = [1, 8, 32], strides = [1, 1, 1]} : vector<1x8x64xf32> to vector<1x8x32xf32>
    %4 = vector.shape_cast %3 : vector<1x8x32xf32> to vector<1x1x8x32xf32>
    %5 = vector.extract_strided_slice %2 {offsets = [0, 0, 32], sizes = [1, 8, 32], strides = [1, 1, 1]} : vector<1x8x64xf32> to vector<1x8x32xf32>
    %6 = vector.shape_cast %5 : vector<1x8x32xf32> to vector<1x1x8x32xf32>
    %7 = vector.broadcast %4 : vector<1x1x8x32xf32> to vector<1x4x8x32xf32>
    %8 = arith.mulf %0, %7 : vector<1x4x8x32xf32>
    %9 = vector.extract_strided_slice %0 {offsets = [0, 0, 0, 16], sizes = [1, 4, 8, 16], strides = [1, 1, 1, 1]} : vector<1x4x8x32xf32> to vector<1x4x8x16xf32>
    %cst = arith.constant 0.000000e+00 : f32
    %10 = vector.broadcast %cst : f32 to vector<1x4x8x16xf32>
    %11 = arith.subf %10, %9 : vector<1x4x8x16xf32>
    %12 = vector.extract_strided_slice %0 {offsets = [0, 0, 0, 0], sizes = [1, 4, 8, 16], strides = [1, 1, 1, 1]} : vector<1x4x8x32xf32> to vector<1x4x8x16xf32>
    %13 = tpu.concatenate %11, %12 in 3 : vector<1x4x8x16xf32>, vector<1x4x8x16xf32> -> vector<1x4x8x32xf32>
    %14 = vector.broadcast %6 : vector<1x1x8x32xf32> to vector<1x4x8x32xf32>
    %15 = arith.mulf %13, %14 : vector<1x4x8x32xf32>
    %16 = arith.addf %8, %15 : vector<1x4x8x32xf32>
    %c0_10 = arith.constant 0 : index
    %c0_11 = arith.constant 0 : index
    %c0_12 = arith.constant 0 : index
    %c0_13 = arith.constant 0 : index
    %17 = vector.load %arg5[%c0_10, %c0_11, %c0_12, %c0_13] : memref<1x4x8x32xf32, #tpu.memory_space<vmem>>, vector<1x4x8x32xf32>
    tpu.vector_store %arg5[%c0_10, %c0_11, %c0_12, %c0_13], %16 {strides = array<i32>} : memref<1x4x8x32xf32, #tpu.memory_space<vmem>>, vector<1x4x8x32xf32>,
    %18 = vector.broadcast %4 : vector<1x1x8x32xf32> to vector<1x4x8x32xf32>
    %19 = arith.mulf %1, %18 : vector<1x4x8x32xf32>
    %20 = vector.extract_strided_slice %1 {offsets = [0, 0, 0, 16], sizes = [1, 4, 8, 16], strides = [1, 1, 1, 1]} : vector<1x4x8x32xf32> to vector<1x4x8x16xf32>
    %cst_14 = arith.constant 0.000000e+00 : f32
    %21 = vector.broadcast %cst_14 : f32 to vector<1x4x8x16xf32>
    %22 = arith.subf %21, %20 : vector<1x4x8x16xf32>
    %23 = vector.extract_strided_slice %1 {offsets = [0, 0, 0, 0], sizes = [1, 4, 8, 16], strides = [1, 1, 1, 1]} : vector<1x4x8x32xf32> to vector<1x4x8x16xf32>
    %24 = tpu.concatenate %22, %23 in 3 : vector<1x4x8x16xf32>, vector<1x4x8x16xf32> -> vector<1x4x8x32xf32>
    %25 = vector.broadcast %6 : vector<1x1x8x32xf32> to vector<1x4x8x32xf32>
    %26 = arith.mulf %24, %25 : vector<1x4x8x32xf32>
    %27 = arith.addf %19, %26 : vector<1x4x8x32xf32>
    %c0_15 = arith.constant 0 : index
    %c0_16 = arith.constant 0 : index
    %c0_17 = arith.constant 0 : index
    %c0_18 = arith.constant 0 : index
    %28 = vector.load %arg6[%c0_15, %c0_16, %c0_17, %c0_18] : memref<1x4x8x32xf32, #tpu.memory_space<vmem>>, vector<1x4x8x32xf32>
    tpu.vector_store %arg6[%c0_15, %c0_16, %c0_17, %c0_18], %27 {strides = array<i32>} : memref<1x4x8x32xf32, #tpu.memory_space<vmem>>, vector<1x4x8x32xf32>,
    return
  }
  func.func @transform_0(%arg0: i32, %arg1: i32) -> (i32, i32, i32, i32) {
    %c0_i32 = arith.constant 0 : i32
    %c0_i32_0 = arith.constant 0 : i32
    %c0_i32_1 = arith.constant 0 : i32
    return %arg0, %c0_i32, %arg1, %c0_i32_0 : i32, i32, i32, i32
  }
  func.func @transform_1(%arg0: i32, %arg1: i32) -> (i32, i32, i32, i32) {
    %c0_i32 = arith.constant 0 : i32
    %c0_i32_0 = arith.constant 0 : i32
    %c0_i32_1 = arith.constant 0 : i32
    return %arg0, %c0_i32, %arg1, %c0_i32_0 : i32, i32, i32, i32
  }
  func.func @transform_2(%arg0: i32, %arg1: i32) -> (i32, i32, i32) {
    %c0_i32 = arith.constant 0 : i32
    %c0_i32_0 = arith.constant 0 : i32
    return %arg0, %arg1, %c0_i32 : i32, i32, i32
  }
  func.func @transform_3(%arg0: i32, %arg1: i32) -> (i32, i32, i32, i32) {
    %c0_i32 = arith.constant 0 : i32
    %c0_i32_0 = arith.constant 0 : i32
    %c0_i32_1 = arith.constant 0 : i32
    return %arg0, %c0_i32, %arg1, %c0_i32_0 : i32, i32, i32, i32
  }
  func.func @transform_4(%arg0: i32, %arg1: i32) -> (i32, i32, i32, i32) {
    %c0_i32 = arith.constant 0 : i32
    %c0_i32_0 = arith.constant 0 : i32
    %c0_i32_1 = arith.constant 0 : i32
    return %arg0, %c0_i32, %arg1, %c0_i32_0 : i32, i32, i32, i32
  }
}

</mosaic_0001>

<llo_original>
// kernel: tpu_custom_call.1
$region0: #{tpu_custom_call.1}
  #allocation0 [shape = 'u32[]', space=smem, size = 0x4, offset = 0x4, fixed_abs, tag = 'smem constant byte address 0x4 - core index']
  #allocation1 [shape = 'u32[144,128]{1,0:T(1,128)}', space=vmem, size = 0x12000, scoped, tag = 'internal scratch']
  %s0 = inlined_call_operand.hbm [shape: f32[2,4,8,32], index: 0, kind: input, shape index: {}]
  %s1 = inlined_call_operand.hbm [shape: f32[2,4,8,32], index: 1, kind: input, shape index: {}]
  %s2 = inlined_call_operand.hbm [shape: f32[2,8,64], index: 2, kind: input, shape index: {}]
  %s3 = inlined_call_operand.hbm [shape: f32[2,4,8,32], index: 3, kind: output, shape index: {0}]
  %s4 = inlined_call_operand.hbm [shape: f32[2,4,8,32], index: 4, kind: output, shape index: {1}]
  %5 = xla_tuple %s3, %s4
  %s6 = sld [smem:[#allocation0]]
  $region65: #{tpu_custom_call.1} parent=0
    _
  %s8 = ssub.s32 1, %s6
  %s9 = scalar_select 0, %s8, %s6
  $region1: #{tpu_custom_call.1} parent=0
    #allocation2 [shape = 'u8[32768]{0}', space=vmem, size = 0x8000, scoped, tag = 'input window, operand 0']
    #allocation3 [shape = 's32[2]{0}', space=sflag, size = 0x8, scoped, tag = 'scoped memory for tpu_custom_call.1']
    #allocation4 [shape = 's32[2]{0}', space=sflag, size = 0x8, scoped, tag = 'scoped memory for tpu_custom_call.1']
    #allocation5 [shape = 'u8[32768]{0}', space=vmem, size = 0x8000, scoped, tag = 'input window, operand 1']
    #allocation6 [shape = 's32[2]{0}', space=sflag, size = 0x8, scoped, tag = 'scoped memory for tpu_custom_call.1']
    #allocation7 [shape = 'u8[8192]{0}', space=vmem, size = 0x2000, scoped, tag = 'input window, operand 2']
    #allocation8 [shape = 'u8[32768]{0}', space=vmem, size = 0x8000, scoped, tag = 'output window, operand 0']
    #allocation9 [shape = 'u8[32768]{0}', space=vmem, size = 0x8000, scoped, tag = 'output window, operand 1']
    #allocation10 [shape = 's32[2]{0}', space=sflag, size = 0x8, scoped, tag = 'scoped memory for tpu_custom_call.1']
    %10 = vsyncpa [#allocation3], 0
    %s11 = scalar_lea.sflag [#allocation3], 1
    %12 = vsyncpa %s11, 0
    %13 = vsyncpa [#allocation6], 0
    %s14 = scalar_lea.sflag [#allocation6], 1
    %15 = vsyncpa %s14, 0
    %16 = vsyncpa [#allocation4], 0
    %s17 = scalar_lea.sflag [#allocation4], 1
    %18 = vsyncpa %s17, 0
    %19 = vsyncpa [#allocation10], 0
    %s20 = scalar_lea.sflag [#allocation10], 1
    %21 = vsyncpa %s20, 0
    loop: start=0, step=1, limit=4
    $region2: #{tpu_custom_call.1} parent=1 // loop_pre_header
      _
    $region3: #{tpu_custom_call.1} parent=1 // loop_header
      %s23 = sphi 0, %s27
      %p24 = scmp.ge.s32.totalorder %s23, 4
      %s30 = sphi 0, %s42
      %s31 = sphi 0, %s38
      %s32 = sphi 0, %s30
      %s33 = sphi 0, %s31
      %s34 = sphi 0, %s32
      %s35 = sphi 0, %s33
      %s47 = sphi 0, %s49
      %s50 = sphi 0, %s47
      %s51 = sphi 0, %s50
      %s67 = sphi 0, %s51
      %s75 = sphi 0, %s77
      %s78 = sphi 0, %s75
      %s79 = sphi 0, %s78
      %s95 = sphi 0, %s79
      %s103 = sphi 0, %s105
      %s106 = sphi 0, %s103
      %s107 = sphi 0, %s106
      %s123 = sphi 0, %s107
      %s131 = sphi 0, %s133
      %s134 = sphi 0, %s131
      %s135 = sphi 0, %s134
      %s151 = sphi 0, %s135
      %s159 = sphi 0, %s161
      %s162 = sphi 0, %s159
      %s163 = sphi 0, %s162
      %s179 = sphi 0, %s163
    $region4: #{tpu_custom_call.1} parent=1 // loop_header_branch
      %26 = sbr.rel (%p24) target = $region8
    $region5: #{tpu_custom_call.1} parent=1 // loop_body
      %s28 = ssub.s32 %s23, 1
      %s29 = ssub.s32 %s23, 2
      %s36 = sadd.s32 1, %s31
      %p37 = scmp.ge.s32.totalorder %s36, 1
      %s38 = scalar_select %p37, 0, %s36
      %s39 = sadd.s32 1, %s30
      %s40 = scalar_select %p37, %s39, %s30
      %p41 = scmp.ge.s32.totalorder %s40, 2
      %s42 = scalar_select %p41, 0, %s40
      %s43 = ssub.s32 %s30, %s42
      %s44 = ssub.s32 %s31, %s38
      %s45 = sor.u32 %s43, %s44
      %p46 = scmp.eq.s32.totalorder %s45, 0
      %s48 = sadd.s32 %s47, 1
      %s49 = scalar_select %p46, %s47, %s48
      %p52 = pneg %p46
      %p53 = scmp.eq.s32.totalorder %s23, 1
      %p54 = por %p52, %p53
      %p55 = scmp.ne.s32.totalorder %s47, %s50
      %p56 = scmp.eq.s32.totalorder %s23, 0
      %p57 = por %p55, %p56
      %p58 = scmp.ne.s32.totalorder %s47, %s50
      %p59 = scmp.eq.s32.totalorder %s28, 1
      %p60 = por %p58, %p59
      %p61 = scmp.ne.s32.totalorder %s50, %s51
      %p62 = scmp.eq.s32.totalorder %s28, 0
      %p63 = por %p61, %p62
      %p64 = scmp.ne.s32.totalorder %s50, %s51
      %p65 = scmp.eq.s32.totalorder %s29, 1
      %p66 = por %p64, %p65
      %p68 = scmp.ne.s32.totalorder %s51, %s67
      %p69 = scmp.eq.s32.totalorder %s29, 0
      %p70 = por %p68, %p69
      %s71 = ssub.s32 %s30, %s42
      %s72 = ssub.s32 %s31, %s38
      %s73 = sor.u32 %s71, %s72
      %p74 = scmp.eq.s32.totalorder %s73, 0
      %s76 = sadd.s32 %s75, 1
      %s77 = scalar_select %p74, %s75, %s76
      %p80 = pneg %p74
      %p81 = scmp.eq.s32.totalorder %s23, 1
      %p82 = por %p80, %p81
      %p83 = scmp.ne.s32.totalorder %s75, %s78
      %p84 = scmp.eq.s32.totalorder %s23, 0
      %p85 = por %p83, %p84
      %p86 = scmp.ne.s32.totalorder %s75, %s78
      %p87 = scmp.eq.s32.totalorder %s28, 1
      %p88 = por %p86, %p87
      %p89 = scmp.ne.s32.totalorder %s78, %s79
      %p90 = scmp.eq.s32.totalorder %s28, 0
      %p91 = por %p89, %p90
      %p92 = scmp.ne.s32.totalorder %s78, %s79
      %p93 = scmp.eq.s32.totalorder %s29, 1
      %p94 = por %p92, %p93
      %p96 = scmp.ne.s32.totalorder %s79, %s95
      %p97 = scmp.eq.s32.totalorder %s29, 0
      %p98 = por %p96, %p97
      %s99 = ssub.s32 %s30, %s42
      %s100 = ssub.s32 %s31, %s38
      %s101 = sor.u32 %s99, %s100
      %p102 = scmp.eq.s32.totalorder %s101, 0
      %s104 = sadd.s32 %s103, 1
      %s105 = scalar_select %p102, %s103, %s104
      %p108 = pneg %p102
      %p109 = scmp.eq.s32.totalorder %s23, 1
      %p110 = por %p108, %p109
      %p111 = scmp.ne.s32.totalorder %s103, %s106
      %p112 = scmp.eq.s32.totalorder %s23, 0
      %p113 = por %p111, %p112
      %p114 = scmp.ne.s32.totalorder %s103, %s106
      %p115 = scmp.eq.s32.totalorder %s28, 1
      %p116 = por %p114, %p115
      %p117 = scmp.ne.s32.totalorder %s106, %s107
      %p118 = scmp.eq.s32.totalorder %s28, 0
      %p119 = por %p117, %p118
      %p120 = scmp.ne.s32.totalorder %s106, %s107
      %p121 = scmp.eq.s32.totalorder %s29, 1
      %p122 = por %p120, %p121
      %p124 = scmp.ne.s32.totalorder %s107, %s123
      %p125 = scmp.eq.s32.totalorder %s29, 0
      %p126 = por %p124, %p125
      %s127 = ssub.s32 %s30, %s42
      %s128 = ssub.s32 %s31, %s38
      %s129 = sor.u32 %s127, %s128
      %p130 = scmp.eq.s32.totalorder %s129, 0
      %s132 = sadd.s32 %s131, 1
      %s133 = scalar_select %p130, %s131, %s132
      %p136 = pneg %p130
      %p137 = scmp.eq.s32.totalorder %s23, 1
      %p138 = por %p136, %p137
      %p139 = scmp.ne.s32.totalorder %s131, %s134
      %p140 = scmp.eq.s32.totalorder %s23, 0
      %p141 = por %p139, %p140
      %p142 = scmp.ne.s32.totalorder %s131, %s134
      %p143 = scmp.eq.s32.totalorder %s28, 1
      %p144 = por %p142, %p143
      %p145 = scmp.ne.s32.totalorder %s134, %s135
      %p146 = scmp.eq.s32.totalorder %s28, 0
      %p147 = por %p145, %p146
      %p148 = scmp.ne.s32.totalorder %s134, %s135
      %p149 = scmp.eq.s32.totalorder %s29, 1
      %p150 = por %p148, %p149
      %p152 = scmp.ne.s32.totalorder %s135, %s151
      %p153 = scmp.eq.s32.totalorder %s29, 0
      %p154 = por %p152, %p153
      %s155 = ssub.s32 %s30, %s42
      %s156 = ssub.s32 %s31, %s38
      %s157 = sor.u32 %s155, %s156
      %p158 = scmp.eq.s32.totalorder %s157, 0
      %s160 = sadd.s32 %s159, 1
      %s161 = scalar_select %p158, %s159, %s160
      %p164 = pneg %p158
      %p165 = scmp.eq.s32.totalorder %s23, 1
      %p166 = por %p164, %p165
      %p167 = scmp.ne.s32.totalorder %s159, %s162
      %p168 = scmp.eq.s32.totalorder %s23, 0
      %p169 = por %p167, %p168
      %p170 = scmp.ne.s32.totalorder %s159, %s162
      %p171 = scmp.eq.s32.totalorder %s28, 1
      %p172 = por %p170, %p171
      %p173 = scmp.ne.s32.totalorder %s162, %s163
      %p174 = scmp.eq.s32.totalorder %s28, 0
      %p175 = por %p173, %p174
      %p176 = scmp.ne.s32.totalorder %s162, %s163
      %p177 = scmp.eq.s32.totalorder %s29, 1
      %p178 = por %p176, %p177
      %p180 = scmp.ne.s32.totalorder %s163, %s179
      %p181 = scmp.eq.s32.totalorder %s29, 0
      %p182 = por %p180, %p181
      %p183 = scmp.le.s32.totalorder 1, %s23
      %p184 = scmp.lt.s32.totalorder %s23, 3
      %p185 = pnand %p183, %p184
      %p186 = pneg %p185
      // Predicated region
      $region9: #{tpu_custom_call.1} parent=5 // pred_check
        _
      $region10: #{tpu_custom_call.1} parent=5 // pred_check_branch
        %188 = sbr.rel (%p185) target = $region12
      $region11: #{tpu_custom_call.1} parent=5 // pred_region
        %s189 = ssub.s32 %s23, 1
      $region12: #{tpu_custom_call.1} parent=5 // pred_fallthru
        _
      %p190 = scmp.lt.s32.totalorder %s23, 2
      // Predicated region
      $region13: #{tpu_custom_call.1} parent=5 // pred_check
        %p191 = pneg %p190
      $region14: #{tpu_custom_call.1} parent=5 // pred_check_branch
        %193 = sbr.rel (%p191) target = $region16
      $region15: #{tpu_custom_call.1} parent=5 // pred_region
        // Predicated region
        $region17: #{tpu_custom_call.1} parent=15 // pred_check
          %p194 = pneg %p57
        $region18: #{tpu_custom_call.1} parent=15 // pred_check_branch
          %196 = sbr.rel (%p194) target = $region20
        $region19: #{tpu_custom_call.1} parent=15 // pred_region
          %s197 = sand.u32 %s47, 1
          %s198 = scalar_lea.sflag [#allocation3], %s197
          %s199 = sand.u32 %s47, 1
          %s200 = smul.addr %s199, 32
          %s201 = scalar_lea.vmem [#allocation2], %s200
          %s203 = ssub.s32 512, 512
          %204 = vsyncadd %s198, %s203
          %s205 = smul.addr %s30, 4
          %s206 = sadd.s32 %s31, %s205
          %s207 = smul.addr %s206, 128
          %s208 = scalar_lea.hbm %s0, %s207
          %s209 = sshll.u32 %s201, 4
          %s210 = int_to_ptr.vmem [resolvable:$true] %s209
          %215 = dma.hbm_to_vmem [thread:$0]  %s208, 512, %s210, %s198, 128, 128, 8
        $region20: #{tpu_custom_call.1} parent=15 // pred_fallthru
          _
        // Predicated region
        $region21: #{tpu_custom_call.1} parent=15 // pred_check
          %p216 = pneg %p85
        $region22: #{tpu_custom_call.1} parent=15 // pred_check_branch
          %218 = sbr.rel (%p216) target = $region24
        $region23: #{tpu_custom_call.1} parent=15 // pred_region
          %s219 = sand.u32 %s23, 1
          %s220 = scalar_lea.sflag [#allocation6], %s219
          %s221 = sand.u32 %s75, 1
          %s222 = smul.addr %s221, 32
          %s223 = scalar_lea.vmem [#allocation5], %s222
          %s225 = ssub.s32 512, 512
          %226 = vsyncadd %s220, %s225
          %s227 = smul.addr %s30, 4
          %s228 = sadd.s32 %s31, %s227
          %s229 = smul.addr %s228, 128
          %s230 = scalar_lea.hbm %s1, %s229
          %s231 = sshll.u32 %s223, 4
          %s232 = int_to_ptr.vmem [resolvable:$true] %s231
          %237 = dma.hbm_to_vmem [thread:$0]  %s230, 512, %s232, %s220, 128, 128, 8
        $region24: #{tpu_custom_call.1} parent=15 // pred_fallthru
          _
        // Predicated region
        $region25: #{tpu_custom_call.1} parent=15 // pred_check
          %p238 = pneg %p113
        $region26: #{tpu_custom_call.1} parent=15 // pred_check_branch
          %240 = sbr.rel (%p238) target = $region28
        $region27: #{tpu_custom_call.1} parent=15 // pred_region
          %s241 = sand.u32 %s23, 1
          %s242 = scalar_lea.sflag [#allocation6], %s241
          %s243 = sand.u32 %s103, 1
          %s244 = smul.addr %s243, 8
          %s245 = scalar_lea.vmem [#allocation7], %s244
          %s247 = ssub.s32 128, 128
          %248 = vsyncadd %s242, %s247
          %s249 = sadd.s32 %s31, %s30
          %s250 = smul.addr %s249, 128
          %s251 = scalar_lea.hbm %s2, %s250
          %s253 = sshll.u32 %s245, 4
          %s254 = int_to_ptr.vmem [resolvable:$true] %s253
          %256 = dma.hbm_to_vmem [thread:$0]  %s251, 128, %s254, %s242
        $region28: #{tpu_custom_call.1} parent=15 // pred_fallthru
          _
      $region16: #{tpu_custom_call.1} parent=5 // pred_fallthru
        _
      %p257 = scmp.le.s32.totalorder 1, %s23
      %p258 = scmp.lt.s32.totalorder %s23, 3
      %p259 = pnand %p257, %p258
      %p260 = pneg %p259
      // Predicated region
      $region29: #{tpu_custom_call.1} parent=5 // pred_check
        _
      $region30: #{tpu_custom_call.1} parent=5 // pred_check_branch
        %262 = sbr.rel (%p259) target = $region32
      $region31: #{tpu_custom_call.1} parent=5 // pred_region
        %s263 = ssub.s32 %s23, 1
        %s264 = sand.u32 %s50, 1
        %s265 = scalar_lea.sflag [#allocation3], %s264
        %s266 = sand.u32 %s50, 1
        %s267 = smul.addr %s266, 32
        %s268 = scalar_lea.vmem [#allocation2], %s267
        // Predicated region
        $region33: #{tpu_custom_call.1} parent=31 // pred_check
          %p269 = pneg %p63
        $region34: #{tpu_custom_call.1} parent=31 // pred_check_branch
          %271 = sbr.rel (%p269) target = $region36
        $region35: #{tpu_custom_call.1} parent=31 // pred_region
          %272 = dma.done %s265, 512
        $region36: #{tpu_custom_call.1} parent=31 // pred_fallthru
          _
        %s273 = sand.u32 %s28, 1
        %s274 = scalar_lea.sflag [#allocation6], %s273
        %s275 = sand.u32 %s78, 1
        %s276 = smul.addr %s275, 32
        %s277 = scalar_lea.vmem [#allocation5], %s276
        // Predicated region
        $region37: #{tpu_custom_call.1} parent=31 // pred_check
          %p278 = pneg %p91
        $region38: #{tpu_custom_call.1} parent=31 // pred_check_branch
          %280 = sbr.rel (%p278) target = $region40
        $region39: #{tpu_custom_call.1} parent=31 // pred_region
          %281 = dma.done %s274, 512
        $region40: #{tpu_custom_call.1} parent=31 // pred_fallthru
          _
        %s282 = sand.u32 %s28, 1
        %s283 = scalar_lea.sflag [#allocation6], %s282
        %s284 = sand.u32 %s106, 1
        %s285 = smul.addr %s284, 8
        %s286 = scalar_lea.vmem [#allocation7], %s285
        // Predicated region
        $region41: #{tpu_custom_call.1} parent=31 // pred_check
          %p287 = pneg %p119
        $region42: #{tpu_custom_call.1} parent=31 // pred_check_branch
          %289 = sbr.rel (%p287) target = $region44
        $region43: #{tpu_custom_call.1} parent=31 // pred_region
          %290 = dma.done %s283, 128
        $region44: #{tpu_custom_call.1} parent=31 // pred_fallthru
          _
        %s291 = sand.u32 %s50, 1
        %s292 = scalar_lea.sflag [#allocation3], %s291
        %s293 = sand.u32 %s50, 1
        %s294 = smul.addr %s293, 32
        %s295 = scalar_lea.vmem [#allocation2], %s294
        %p296 = pneg %p63
        %p297 = pneg %p60
        %s298 = sand.u32 %s28, 1
        %s299 = scalar_lea.sflag [#allocation6], %s298
        %s300 = sand.u32 %s78, 1
        %s301 = smul.addr %s300, 32
        %s302 = scalar_lea.vmem [#allocation5], %s301
        %p303 = pneg %p91
        %p304 = pneg %p88
        %s305 = sand.u32 %s28, 1
        %s306 = scalar_lea.sflag [#allocation6], %s305
        %s307 = sand.u32 %s106, 1
        %s308 = smul.addr %s307, 8
        %s309 = scalar_lea.vmem [#allocation7], %s308
        %p310 = pneg %p119
        %p311 = pneg %p116
        %p312 = pneg %p147
        %p313 = pneg %p144
        %s314 = sand.u32 %s134, 1
        %s315 = scalar_lea.sflag [#allocation4], %s314
        %s316 = sand.u32 %s134, 1
        %s317 = smul.addr %s316, 32
        %s318 = scalar_lea.vmem [#allocation8], %s317
        %p319 = pneg %p175
        %p320 = pneg %p172
        %s321 = sand.u32 %s162, 1
        %s322 = scalar_lea.sflag [#allocation10], %s321
        %s323 = sand.u32 %s162, 1
        %s324 = smul.addr %s323, 32
        %s325 = scalar_lea.vmem [#allocation9], %s324
        %v326 = vld [vmem:[%s268] sm:$0xff]
        %v327 = vld [vmem:[%s268 + $0x8] sm:$0xff]
        %v328 = vld [vmem:[%s268 + $0x10] sm:$0xff]
        %v329 = vld [vmem:[%s268 + $0x18] sm:$0xff]
        %v330 = vld [vmem:[%s277] sm:$0xff]
        %v331 = vld [vmem:[%s277 + $0x8] sm:$0xff]
        %v332 = vld [vmem:[%s277 + $0x10] sm:$0xff]
        %v333 = vld [vmem:[%s277 + $0x18] sm:$0xff]
        %v334 = vld [vmem:[%s286] sm:$0xff]
        %v335 = vmul.f32 %v326, %v334
        %v336 = vmul.f32 %v327, %v334
        %v337 = vmul.f32 %v328, %v334
        %v338 = vmul.f32 %v329, %v334
        %v339 = vsub.f32 0.0, %v326
        %v340 = vsub.f32 0.0, %v327
        %v341 = vsub.f32 0.0, %v328
        %v342 = vsub.f32 0.0, %v329
        %347 = vrot.lane.b32.xlu0 %v339, 112
        %v348 = vpop.permute.xlu0 %347
        %349 = vrot.lane.b32.xlu0 %v340, 112
        %v350 = vpop.permute.xlu0 %349
        %351 = vrot.lane.b32.xlu0 %v341, 112
        %v352 = vpop.permute.xlu0 %351
        %353 = vrot.lane.b32.xlu0 %v342, 112
        %v354 = vpop.permute.xlu0 %353
        %363 = vrot.lane.b32.xlu0 %v326, 16
        %v364 = vpop.permute.xlu0 %363
        %365 = vrot.lane.b32.xlu0 %v327, 16
        %v366 = vpop.permute.xlu0 %365
        %367 = vrot.lane.b32.xlu0 %v328, 16
        %v368 = vpop.permute.xlu0 %367
        %369 = vrot.lane.b32.xlu0 %v329, 16
        %v370 = vpop.permute.xlu0 %369
        %vm375 = vcmask 130048
        %v376 = vsel %vm375, %v348, %v364
        %v377 = vsel %vm375, %v350, %v366
        %v378 = vsel %vm375, %v352, %v368
        %v379 = vsel %vm375, %v354, %v370
        %381 = vrot.lane.b32.xlu0 %v334, 96
        %v382 = vpop.permute.xlu0 %381
        %v384 = vmul.f32 %v376, %v382
        %v385 = vmul.f32 %v377, %v382
        %v386 = vmul.f32 %v378, %v382
        %v387 = vmul.f32 %v379, %v382
        %v388 = vadd.f32 %v335, %v384
        %v389 = vadd.f32 %v336, %v385
        %v390 = vadd.f32 %v337, %v386
        %v391 = vadd.f32 %v338, %v387
        %vm392 = vcmask 261120
        %393 = vst.msk [vmem:[%s318] sm:$0xff] %vm392, %v388
        %394 = vst.msk [vmem:[%s318 + $0x8] sm:$0xff] %vm392, %v389
        %395 = vst.msk [vmem:[%s318 + $0x10] sm:$0xff] %vm392, %v390
        %396 = vst.msk [vmem:[%s318 + $0x18] sm:$0xff] %vm392, %v391
        %v397 = vmul.f32 %v330, %v334
        %v398 = vmul.f32 %v331, %v334
        %v399 = vmul.f32 %v332, %v334
        %v400 = vmul.f32 %v333, %v334
        %v401 = vsub.f32 0.0, %v330
        %v402 = vsub.f32 0.0, %v331
        %v403 = vsub.f32 0.0, %v332
        %v404 = vsub.f32 0.0, %v333
        %409 = vrot.lane.b32.xlu0 %v401, 112
        %v410 = vpop.permute.xlu0 %409
        %411 = vrot.lane.b32.xlu0 %v402, 112
        %v412 = vpop.permute.xlu0 %411
        %413 = vrot.lane.b32.xlu0 %v403, 112
        %v414 = vpop.permute.xlu0 %413
        %415 = vrot.lane.b32.xlu0 %v404, 112
        %v416 = vpop.permute.xlu0 %415
        %425 = vrot.lane.b32.xlu0 %v330, 16
        %v426 = vpop.permute.xlu0 %425
        %427 = vrot.lane.b32.xlu0 %v331, 16
        %v428 = vpop.permute.xlu0 %427
        %429 = vrot.lane.b32.xlu0 %v332, 16
        %v430 = vpop.permute.xlu0 %429
        %431 = vrot.lane.b32.xlu0 %v333, 16
        %v432 = vpop.permute.xlu0 %431
        %v437 = vsel %vm375, %v410, %v426
        %v438 = vsel %vm375, %v412, %v428
        %v439 = vsel %vm375, %v414, %v430
        %v440 = vsel %vm375, %v416, %v432
        %v441 = vmul.f32 %v437, %v382
        %v442 = vmul.f32 %v438, %v382
        %v443 = vmul.f32 %v439, %v382
        %v444 = vmul.f32 %v440, %v382
        %v445 = vadd.f32 %v397, %v441
        %v446 = vadd.f32 %v398, %v442
        %v447 = vadd.f32 %v399, %v443
        %v448 = vadd.f32 %v400, %v444
        %449 = vst.msk [vmem:[%s325] sm:$0xff] %vm392, %v445
        %450 = vst.msk [vmem:[%s325 + $0x8] sm:$0xff] %vm392, %v446
        %451 = vst.msk [vmem:[%s325 + $0x10] sm:$0xff] %vm392, %v447
        %452 = vst.msk [vmem:[%s325 + $0x18] sm:$0xff] %vm392, %v448
        %s453 = sand.u32 %s134, 1
        %s454 = scalar_lea.sflag [#allocation4], %s453
        %s455 = sand.u32 %s134, 1
        %s456 = smul.addr %s455, 32
        %s457 = scalar_lea.vmem [#allocation8], %s456
        %s458 = sand.u32 %s162, 1
        %s459 = scalar_lea.sflag [#allocation10], %s458
        %s460 = sand.u32 %s162, 1
        %s461 = smul.addr %s460, 32
        %s462 = scalar_lea.vmem [#allocation9], %s461
        // Predicated region
        $region45: #{tpu_custom_call.1} parent=31 // pred_check
          %p463 = pneg %p144
        $region46: #{tpu_custom_call.1} parent=31 // pred_check_branch
          %465 = sbr.rel (%p463) target = $region48
        $region47: #{tpu_custom_call.1} parent=31 // pred_region
          %s467 = ssub.s32 512, 512
          %468 = vsyncadd %s454, %s467
          %s469 = smul.addr %s32, 4
          %s470 = sadd.s32 %s33, %s469
          %s471 = smul.addr %s470, 128
          %s472 = scalar_lea.hbm %s3, %s471
          %s473 = sshll.u32 %s457, 4
          %s474 = int_to_ptr.vmem [resolvable:$true] %s473
          %479 = dma.vmem_to_hbm [thread:$0]  %s474, 512, %s472, %s454, 128, 128, 8
        $region48: #{tpu_custom_call.1} parent=31 // pred_fallthru
          _
        // Predicated region
        $region49: #{tpu_custom_call.1} parent=31 // pred_check
          %p480 = pneg %p172
        $region50: #{tpu_custom_call.1} parent=31 // pred_check_branch
          %482 = sbr.rel (%p480) target = $region52
        $region51: #{tpu_custom_call.1} parent=31 // pred_region
          %s484 = ssub.s32 512, 512
          %485 = vsyncadd %s459, %s484
          %s486 = smul.addr %s32, 4
          %s487 = sadd.s32 %s33, %s486
          %s488 = smul.addr %s487, 128
          %s489 = scalar_lea.hbm %s4, %s488
          %s490 = sshll.u32 %s462, 4
          %s491 = int_to_ptr.vmem [resolvable:$true] %s490
          %496 = dma.vmem_to_hbm [thread:$0]  %s491, 512, %s489, %s459, 128, 128, 8
        $region52: #{tpu_custom_call.1} parent=31 // pred_fallthru
          _
      $region32: #{tpu_custom_call.1} parent=5 // pred_fallthru
        _
      %p497 = scmp.le.s32.totalorder 2, %s23
      // Predicated region
      $region53: #{tpu_custom_call.1} parent=5 // pred_check
        %p498 = pneg %p497
      $region54: #{tpu_custom_call.1} parent=5 // pred_check_branch
        %500 = sbr.rel (%p498) target = $region56
      $region55: #{tpu_custom_call.1} parent=5 // pred_region
        %s501 = ssub.s32 %s23, 2
        // Predicated region
        $region57: #{tpu_custom_call.1} parent=55 // pred_check
          %p502 = pneg %p150
        $region58: #{tpu_custom_call.1} parent=55 // pred_check_branch
          %504 = sbr.rel (%p502) target = $region60
        $region59: #{tpu_custom_call.1} parent=55 // pred_region
          %s505 = sand.u32 %s135, 1
          %s506 = scalar_lea.sflag [#allocation4], %s505
          %s507 = sand.u32 %s135, 1
          %s508 = smul.addr %s507, 32
          %s509 = scalar_lea.vmem [#allocation8], %s508
          %510 = dma.done %s506, 512
        $region60: #{tpu_custom_call.1} parent=55 // pred_fallthru
          _
        // Predicated region
        $region61: #{tpu_custom_call.1} parent=55 // pred_check
          %p511 = pneg %p178
        $region62: #{tpu_custom_call.1} parent=55 // pred_check_branch
          %513 = sbr.rel (%p511) target = $region64
        $region63: #{tpu_custom_call.1} parent=55 // pred_region
          %s514 = sand.u32 %s163, 1
          %s515 = scalar_lea.sflag [#allocation10], %s514
          %s516 = sand.u32 %s163, 1
          %s517 = smul.addr %s516, 32
          %s518 = scalar_lea.vmem [#allocation9], %s517
          %519 = dma.done %s515, 512
        $region64: #{tpu_custom_call.1} parent=55 // pred_fallthru
          _
      $region56: #{tpu_custom_call.1} parent=5 // pred_fallthru
        _
    $region6: #{tpu_custom_call.1} parent=1 // loop_footer
      %s27 = sadd.s32 1, %s23
    $region7: #{tpu_custom_call.1} parent=1 // loop_footer_branch
      %22 = sbr.rel target = $region3
    $region8: #{tpu_custom_call.1} parent=1 // loop_exit
      _
    %520 = vsyncpa [#allocation3], 1
    %s521 = scalar_lea.sflag [#allocation3], 1
    %522 = vsyncpa %s521, 1
    %523 = vsyncpa [#allocation6], 1
    %s524 = scalar_lea.sflag [#allocation6], 1
    %525 = vsyncpa %s524, 1
    %526 = vsyncpa [#allocation4], 1
    %s527 = scalar_lea.sflag [#allocation4], 1
    %528 = vsyncpa %s527, 1
    %529 = vsyncpa [#allocation10], 1
    %s530 = scalar_lea.sflag [#allocation10], 1
    %531 = vsyncpa %s530, 1

</llo_original>
